<compile_context>
chip_gen: v5e
topology: v5e:2x2
jax: 0.10.0
libtpu: 0.0.40
codegen_flags: <defaults>
</compile_context>

<pallas_src>
import functools

import jax
import jax.numpy as jnp
from jax.experimental import pallas as pl
from jax.experimental.pallas import tpu as pltpu


def _interactive_attention_kernel(a_ref, o_ref, w2_ref, out_ref, *,
                                  lo_valid, h_chunks):
    # a_ref  : (TB, TLa, H)       compute dtype, b1 already folded in
    # o_ref  : (TB, H, Lo_pad)    compute dtype, opinion projection TRANSPOSED so the
    #                             padded Lo axis (multiple of 128) is the lane axis
    # w2_ref : (H, 1)             compute dtype
    # out_ref: (TB, TLa, Lo_pad)  float32
    tb, tla, _ = a_ref.shape
    lo_pad = o_ref.shape[2]

    # Hoisted once per grid step (JAX does not CSE broadcast/iota inside loops).
    w2_full = w2_ref[...]                                          # (H, 1)
    col = (jax.lax.broadcasted_iota(jnp.int32, (tla, lo_pad), 1)
           if lo_pad != lo_valid else None)

    def body(b):
        a_b = a_ref.at[b]                                          # (TLa, H) view
        o_b = o_ref.at[b]                                          # (H, Lo_pad) view

        # H-chunked pairwise combine + tanh.  The heavy (TLa, Hc, Lo_pad) tensor is
        # lane-dense in Lo_pad; the H reduction is a sublane fold accumulated in f32.
        scores = None
        for h0, h1 in h_chunks:
            a_c = a_b[:, h0:h1]                                    # (TLa, Hc)
            o_c = o_b[h0:h1, :]                                    # (Hc, Lo_pad)
            hidden = jnp.tanh(a_c[:, :, None] + o_c[None, :, :])   # (TLa, Hc, Lo_pad)
            w2_c = w2_full[h0:h1, :][None, :, :]                   # (1, Hc, 1)
            contrib = jnp.sum((hidden * w2_c).astype(jnp.float32), axis=1)
            scores = contrib if scores is None else scores + contrib

        if col is not None:                                        # mask padded Lo cols
            scores = jnp.where(col < lo_valid, scores, jnp.float32(-1e30))

        # Row softmax over the (padded) opinion axis.
        m = jnp.max(scores, axis=-1, keepdims=True)
        e = jnp.exp(scores - m)
        denom = jnp.sum(e, axis=-1, keepdims=True)                 # (TLa, 1)
        inv = pl.reciprocal(denom, approx=True)
        inv = inv * (2.0 - denom * inv)                            # one Newton step
        out_ref[b] = (e * inv).astype(out_ref.dtype)

    if tb == 1:
        body(0)
    else:
        # fori_loop (not a Python unroll) bounds the live set to one batch element.
        def loop_body(b, carry):
            body(b)
            return carry
        jax.lax.fori_loop(0, tb, loop_body, 0)


def _vmem_capacity_bytes():
    try:
        info = pltpu.get_tpu_info()
        cap = getattr(info, "vmem_capacity_bytes", None)
        if cap:
            return int(cap)
    except Exception:
        pass
    return 64 << 20            # conservative fallback (v7x per-TensorCore VMEM)


def _default_compute_dtype():
    # bf16 VPU/EUP exists on v6e/v7x and newer; v5e (and earlier) keep f32 compute.
    try:
        kind = jax.devices()[0].device_kind.lower()
    except Exception:
        return jnp.float32
    if any(tag in kind for tag in ("v2", "v3", "v4", "v5")):
        return jnp.float32
    return jnp.bfloat16


def _choose_tiles(B, La, Lo_pad, H, h_chunk, cbytes, usable_bytes):
    """Pick (TB, TLa) so all live VMEM (compute temporaries + double-buffered
    pipeline blocks) stays under `usable_bytes`.  Returns (TB, TLa, est_bytes)."""
    # Per La-row live bytes inside a step (TB = 1 basis):
    #   pair + tanh + hidden*w2 (compute dtype) + f32 copy for the reduce, plus
    #   scores/e/softmax temps (f32), plus the double-buffered a and out blocks.
    row_bytes = ((3 * cbytes + 4) * h_chunk * Lo_pad
                 + 3 * Lo_pad * 4
                 + 2 * H * cbytes
                 + 2 * Lo_pad * 4)
    # Double-buffered opinion block (resident across the La grid axis), per TB elem.
    o_bytes = 2 * H * Lo_pad * cbytes

    La8 = ((La + 7) // 8) * 8
    max_rows = (usable_bytes - o_bytes) // row_bytes
    max_rows = max(max_rows, 8)            # floor; vmem_limit is raised to match
    # TODO(synk): very large Lo*H (opinion block alone exceeding VMEM) would need a
    # flash-style running softmax over Lo tiles; out of scope for this module.

    if max_rows >= La8:
        # Whole La fits in one step.  Batch multiple b per step only while the grid
        # still has >= 2 steps (keeps megacore / v7x's 2nd TC busy) and VMEM allows.
        tla = La8
        per_b = o_bytes + tla * row_bytes
        tb_cap = max(1, usable_bytes // per_b)
        tb_cap = min(tb_cap, max(1, B // 2))
        tb = 1
        for t in range(min(B, tb_cap), 0, -1):
            if B % t == 0:
                tb = t
                break
        if B == 1 and La8 >= 16:           # B == 1: split La instead for 2 steps
            tla = ((La8 // 2 + 7) // 8) * 8
    else:
        tla = max(8, (max_rows // 8) * 8)  # sublane-aligned La tile
        tb = 1

    est = tb * (o_bytes + tla * row_bytes) + (1 << 20)
    return tb, tla, est


def interactive_attention(aspect_features, opinion_features, params, *,
                          compute_dtype=None):
    """aspect: (B, La, H), opinion: (B, Lo, H) -> attention weights (B, La, Lo).

    Matches InteractiveAttention.forward: softmax_j( w2 . tanh(W1 [a_i ; o_j] + b1) + b2 ).
    b2 is dropped (cancels under softmax); b1 is folded into the aspect projection.
    """
    w1a, w1o, b1, w2, _b2 = params                # (H,H), (H,H), (1,H), (H,1), (1,1)
    B, La, H = aspect_features.shape
    Lo = opinion_features.shape[1]

    if compute_dtype is None:
        compute_dtype = _default_compute_dtype()
    cbytes = jnp.dtype(compute_dtype).itemsize

    # Hoisted projections: one MXU-friendly batched matmul each (M = B*L).  The
    # opinion side is emitted transposed to (B, H, Lo) so that, after padding,
    # Lo_pad (multiple of 128) is the lane axis of the pairwise tensor.
    a_proj = (jnp.einsum('blh,hk->blk', aspect_features, w1a,
                         preferred_element_type=jnp.float32)
              + b1[0]).astype(compute_dtype)                       # (B, La, H)
    o_proj_t = jnp.einsum('blh,hk->bkl', opinion_features, w1o,
                          preferred_element_type=jnp.float32
                          ).astype(compute_dtype)                  # (B, H, Lo)
    w2_col = w2.reshape(H, 1).astype(compute_dtype)                # (H, 1)

    Lo_pad = ((Lo + 127) // 128) * 128

    # Exact H chunking; chunk starts are multiples of 256 (lane/sublane aligned).
    if H <= 256:
        h_chunks = ((0, H),)
    else:
        h_chunks = tuple((h0, min(h0 + 256, H)) for h0 in range(0, H, 256))
    h_chunk = h_chunks[0][1] - h_chunks[0][0]

    cap = _vmem_capacity_bytes()
    usable = max(8 << 20, int(cap * 0.45))        # tile budget; rest = pipeline slack
    TB, TLa, est = _choose_tiles(B, La, Lo_pad, H, h_chunk, cbytes, usable)
    La_pad = ((La + TLa - 1) // TLa) * TLa

    a_proj = jnp.pad(a_proj, ((0, 0), (0, La_pad - La), (0, 0)))
    o_proj_t = jnp.pad(o_proj_t, ((0, 0), (0, 0), (0, Lo_pad - Lo)))

    vmem_limit = max(48 << 20, int(est * 1.5) + (8 << 20))
    vmem_limit = min(vmem_limit, cap - (8 << 20))
    vmem_limit = max(vmem_limit, 32 << 20)

    kernel = functools.partial(_interactive_attention_kernel,
                               lo_valid=Lo, h_chunks=h_chunks)

    out = pl.pallas_call(
        kernel,
        out_shape=jax.ShapeDtypeStruct((B, La_pad, Lo_pad), jnp.float32),
        grid_spec=pltpu.PrefetchScalarGridSpec(
            num_scalar_prefetch=0,
            grid=(B // TB, La_pad // TLa),
            in_specs=[
                pl.BlockSpec((TB, TLa, H), lambda b, i: (b, i, 0)),
                pl.BlockSpec((TB, H, Lo_pad), lambda b, i: (b, 0, 0)),
                pl.BlockSpec((H, 1), lambda b, i: (0, 0)),
            ],
            out_specs=pl.BlockSpec((TB, TLa, Lo_pad), lambda b, i: (b, i, 0)),
        ),
        compiler_params=pltpu.CompilerParams(
            # Both axes are independent -> megacore / v7x dual-TC sharding.
            dimension_semantics=("parallel", "parallel"),
            vmem_limit_bytes=int(vmem_limit),
        ),
    )(a_proj, o_proj_t, w2_col)

    return out[:, :La, :Lo]


def _reference(aspect_features, opinion_features, params):
    """Plain-JAX reference mirroring the PyTorch forward exactly (incl. b2)."""
    w1a, w1o, b1, w2, b2 = params
    B, La, H = aspect_features.shape
    Lo = opinion_features.shape[1]
    a_exp = jnp.broadcast_to(aspect_features[:, :, None, :], (B, La, Lo, H))
    o_exp = jnp.broadcast_to(opinion_features[:, None, :, :], (B, La, Lo, H))
    combined = jnp.concatenate([a_exp, o_exp], axis=-1)            # (B, La, Lo, 2H)
    w1 = jnp.concatenate([w1a, w1o], axis=0)                       # (2H, H)
    hidden = jnp.tanh(combined @ w1 + b1[0])
    scores = (hidden @ w2)[..., 0] + b2[0, 0]                      # (B, La, Lo)
    return jax.nn.softmax(scores, axis=-1)


if __name__ == "__main__":
    B, La, Lo, H = 2, 8, 8, 32

    key = jax.random.PRNGKey(0)
    k_a, k_o, k_w1, k_b1, k_w2, k_b2 = jax.random.split(key, 6)

    aspect_features = jax.random.normal(k_a, (B, La, H), dtype=jnp.float32)
    opinion_features = jax.random.normal(k_o, (B, Lo, H), dtype=jnp.float32)

    # Deterministic synthetic parameters (nn.Linear(2H, H) and nn.Linear(H, 1)).
    scale1 = 1.0 / (2 * H) ** 0.5
    scale2 = 1.0 / H ** 0.5
    w1_full = jax.random.uniform(k_w1, (2 * H, H), minval=-scale1, maxval=scale1,
                                 dtype=jnp.float32)                # transposed vs. torch
    b1 = jax.random.uniform(k_b1, (1, H), minval=-scale1, maxval=scale1, dtype=jnp.float32)
    w2 = jax.random.uniform(k_w2, (H, 1), minval=-scale2, maxval=scale2, dtype=jnp.float32)
    b2 = jax.random.uniform(k_b2, (1, 1), minval=-scale2, maxval=scale2, dtype=jnp.float32)

    params = (w1_full[:H, :], w1_full[H:, :], b1, w2, b2)

    run_f32 = jax.jit(lambda a, o: interactive_attention(
        a, o, params, compute_dtype=jnp.float32))
    run_bf16 = jax.jit(lambda a, o: interactive_attention(
        a, o, params, compute_dtype=jnp.bfloat16))
    run_auto = jax.jit(lambda a, o: interactive_attention(a, o, params))

    ref = _reference(aspect_features, opinion_features, params)

    out = jax.block_until_ready(run_f32(aspect_features, opinion_features))
    assert out.shape == (B, La, Lo)
    assert jnp.allclose(out, ref, atol=1e-5, rtol=1e-5), "mismatch vs. JAX reference (f32)"

    # bf16-before-add fast path (v6e/v7x EUP/VPU); looser tolerance by construction.
    out_bf16 = jax.block_until_ready(run_bf16(aspect_features, opinion_features))
    assert out_bf16.shape == (B, La, Lo)
    assert jnp.allclose(out_bf16, ref, atol=5e-2, rtol=5e-2), "mismatch vs. JAX reference (bf16)"

    # Chip-gated default dtype path (bf16 on v6e/v7x, f32 on v5e and older).
    out_auto = jax.block_until_ready(run_auto(aspect_features, opinion_features))
    assert out_auto.shape == (B, La, Lo)
    assert jnp.allclose(out_auto, ref, atol=5e-2, rtol=5e-2), "mismatch vs. JAX reference (auto)"

    print("KERNEL_OK")
</pallas_src>

<mosaic_0001>
module attributes {stable_mosaic.version = 11 : i64} {
  func.func @_interactive_attention_kernel(%arg0: i32, %arg1: i32, %arg2: memref<1x8x32xf32, #tpu.memory_space<vmem>>, %arg3: memref<1x32x128xf32, #tpu.memory_space<vmem>>, %arg4: memref<32x1xf32, #tpu.memory_space<vmem>>, %arg5: memref<1x8x128xf32, #tpu.memory_space<vmem>>) attributes {dimension_semantics = [#tpu.dimension_semantics<parallel>, #tpu.dimension_semantics<parallel>], iteration_bounds = array<i64: 2, 1>, scalar_prefetch = 0 : i64, scratch_operands = 0 : i64, tpu.core_type = #tpu.core_type<tc>, window_params = [{transform_indices = @transform_0, window_bounds = array<i64: 1, 8, 32>}, {transform_indices = @transform_1, window_bounds = array<i64: 1, 32, 128>}, {pipeline_mode = #tpu.pipeline_mode<synchronous>, transform_indices = @transform_2, window_bounds = array<i64: 32, 1>}, {transform_indices = @transform_3, window_bounds = array<i64: 1, 8, 128>}]} {
    %c0 = arith.constant 0 : index
    %c0_0 = arith.constant 0 : index
    %0 = vector.load %arg4[%c0, %c0_0] : memref<32x1xf32, #tpu.memory_space<vmem>>, vector<32x1xf32>
    %1 = tpu.iota {dimensions = array<i32: 1>} : vector<8x128xi32>
    %c0_i32 = arith.constant 0 : i32
    %c0_i32_1 = arith.constant 0 : i32
    %c0_i32_2 = arith.constant 0 : i32
    %2 = tpu.memref_slice %arg2[%c0_i32, %c0_i32_1, %c0_i32_2] : memref<1x8x32xf32, #tpu.memory_space<vmem>> -> memref<1x8x32xf32, #tpu.memory_space<vmem>>
    %3 = tpu.memref_squeeze %2 : memref<1x8x32xf32, #tpu.memory_space<vmem>> -> memref<8x32xf32, #tpu.memory_space<vmem>>
    %c0_3 = arith.constant 0 : index
    %c0_4 = arith.constant 0 : index
    %4 = vector.load %3[%c0_3, %c0_4] : memref<8x32xf32, #tpu.memory_space<vmem>>, vector<8x32xf32>
    %c0_i32_5 = arith.constant 0 : i32
    %c0_i32_6 = arith.constant 0 : i32
    %c0_i32_7 = arith.constant 0 : i32
    %5 = tpu.memref_slice %arg3[%c0_i32_5, %c0_i32_6, %c0_i32_7] : memref<1x32x128xf32, #tpu.memory_space<vmem>> -> memref<1x32x128xf32, #tpu.memory_space<vmem>>
    %6 = tpu.memref_squeeze %5 : memref<1x32x128xf32, #tpu.memory_space<vmem>> -> memref<32x128xf32, #tpu.memory_space<vmem>>
    %c0_8 = arith.constant 0 : index
    %c0_9 = arith.constant 0 : index
    %7 = vector.load %6[%c0_8, %c0_9] : memref<32x128xf32, #tpu.memory_space<vmem>>, vector<32x128xf32>
    %8 = vector.shape_cast %4 : vector<8x32xf32> to vector<8x32x1xf32>
    %9 = vector.shape_cast %7 : vector<32x128xf32> to vector<1x32x128xf32>
    %10 = vector.broadcast %8 : vector<8x32x1xf32> to vector<8x32x128xf32>
    %11 = vector.broadcast %9 : vector<1x32x128xf32> to vector<8x32x128xf32>
    %12 = arith.addf %10, %11 : vector<8x32x128xf32>
    %13 = math.tanh %12 : vector<8x32x128xf32>
    %14 = vector.shape_cast %0 : vector<32x1xf32> to vector<1x32x1xf32>
    %15 = vector.broadcast %14 : vector<1x32x1xf32> to vector<8x32x128xf32>
    %16 = arith.mulf %13, %15 : vector<8x32x128xf32>
    %cst = arith.constant dense<0.000000e+00> : vector<8x128xf32>
    %17 = vector.multi_reduction <add>, %16, %cst [1] : vector<8x32x128xf32> to vector<8x128xf32>
    %c8_i32 = arith.constant 8 : i32
    %18 = vector.broadcast %c8_i32 : i32 to vector<8x128xi32>
    %19 = arith.cmpi slt, %1, %18 : vector<8x128xi32>
    %cst_10 = arith.constant -1.000000e+30 : f32
    %20 = vector.broadcast %cst_10 : f32 to vector<8x128xf32>
    %21 = arith.select %19, %17, %20 : vector<8x128xi1>, vector<8x128xf32>
    %cst_11 = arith.constant dense<0xFF800000> : vector<8xf32>
    %22 = vector.multi_reduction <maximumf>, %21, %cst_11 [1] : vector<8x128xf32> to vector<8xf32>
    %23 = vector.shape_cast %22 : vector<8xf32> to vector<8x1xf32>
    %24 = vector.broadcast %23 : vector<8x1xf32> to vector<8x128xf32>
    %25 = arith.subf %21, %24 : vector<8x128xf32>
    %26 = math.exp %25 : vector<8x128xf32>
    %cst_12 = arith.constant dense<0.000000e+00> : vector<8xf32>
    %27 = vector.multi_reduction <add>, %26, %cst_12 [1] : vector<8x128xf32> to vector<8xf32>
    %28 = vector.shape_cast %27 : vector<8xf32> to vector<8x1xf32>
    %29 = tpu.reciprocal %28 {approx = true} : vector<8x1xf32> -> vector<8x1xf32>
    %30 = arith.mulf %28, %29 : vector<8x1xf32>
    %cst_13 = arith.constant 2.000000e+00 : f32
    %31 = vector.broadcast %cst_13 : f32 to vector<8x1xf32>
    %32 = arith.subf %31, %30 : vector<8x1xf32>
    %33 = arith.mulf %29, %32 : vector<8x1xf32>
    %34 = vector.broadcast %33 : vector<8x1xf32> to vector<8x128xf32>
    %35 = arith.mulf %26, %34 : vector<8x128xf32>
    %c0_14 = arith.constant 0 : index
    %c0_15 = arith.constant 0 : index
    %c0_16 = arith.constant 0 : index
    %36 = vector.load %arg5[%c0_14, %c0_15, %c0_16] : memref<1x8x128xf32, #tpu.memory_space<vmem>>, vector<1x8x128xf32>
    %37 = vector.shape_cast %36 : vector<1x8x128xf32> to vector<8x128xf32>
    %38 = vector.shape_cast %35 : vector<8x128xf32> to vector<1x8x128xf32>
    tpu.vector_store %arg5[%c0_14, %c0_15, %c0_16], %38 {strides = array<i32>} : memref<1x8x128xf32, #tpu.memory_space<vmem>>, vector<1x8x128xf32>,
    return
  }
  func.func @transform_0(%arg0: i32, %arg1: i32) -> (i32, i32, i32) {
    %c0_i32 = arith.constant 0 : i32
    %c0_i32_0 = arith.constant 0 : i32
    return %arg0, %arg1, %c0_i32 : i32, i32, i32
  }
  func.func @transform_1(%arg0: i32, %arg1: i32) -> (i32, i32, i32) {
    %c0_i32 = arith.constant 0 : i32
    %c0_i32_0 = arith.constant 0 : i32
    %c0_i32_1 = arith.constant 0 : i32
    return %arg0, %c0_i32, %c0_i32_0 : i32, i32, i32
  }
  func.func @transform_2(%arg0: i32, %arg1: i32) -> (i32, i32) {
    %c0_i32 = arith.constant 0 : i32
    %c0_i32_0 = arith.constant 0 : i32
    %c0_i32_1 = arith.constant 0 : i32
    return %c0_i32, %c0_i32_0 : i32, i32
  }
  func.func @transform_3(%arg0: i32, %arg1: i32) -> (i32, i32, i32) {
    %c0_i32 = arith.constant 0 : i32
    %c0_i32_0 = arith.constant 0 : i32
    return %arg0, %arg1, %c0_i32 : i32, i32, i32
  }
}

</mosaic_0001>

<llo_original>
// kernel: _lambda_.1
$region0: #{_lambda_.1}
  #allocation0 [shape = 'u32[]', space=smem, size = 0x4, offset = 0x4, fixed_abs, tag = 'smem constant byte address 0x4 - core index']
  #allocation1 [shape = 'u32[72,128]{1,0:T(1,128)}', space=vmem, size = 0x9000, scoped, tag = 'internal scratch']
  %s0 = inlined_call_operand.vmem [shape: f32[2,8,32], index: 0, kind: input, shape index: {}]
  %s1 = inlined_call_operand.vmem [shape: f32[2,32,128], index: 1, kind: input, shape index: {}]
  %s2 = inlined_call_operand.vmem [shape: f32[32,1], index: 2, kind: input, shape index: {}]
  %s3 = inlined_call_operand.hbm [shape: f32[2,8,128], index: 3, kind: output, shape index: {}]
  %s4 = sld [smem:[#allocation0]]
  $region45: #{_lambda_.1} parent=0
    _
  %s6 = ssub.s32 1, %s4
  %s7 = scalar_select 0, %s6, %s4
  $region1: #{_lambda_.1} parent=0
    #allocation2 [shape = 'u8[8192]{0}', space=vmem, size = 0x2000, scoped, tag = 'output window, operand 0']
    #allocation3 [shape = 's32[2]{0}', space=sflag, size = 0x8, scoped, tag = 'scoped memory for _lambda_.1']
    %8 = vsyncpa [#allocation3], 0
    %s9 = scalar_lea.sflag [#allocation3], 1
    %10 = vsyncpa %s9, 0
    loop: start=0, step=1, limit=4
    $region2: #{_lambda_.1} parent=1 // loop_pre_header
      _
    $region3: #{_lambda_.1} parent=1 // loop_header
      %s12 = sphi 0, %s16
      %p13 = scmp.ge.s32.totalorder %s12, 4
      %s19 = sphi 0, %s31
      %s20 = sphi 0, %s27
      %s21 = sphi 0, %s19
      %s22 = sphi 0, %s20
      %s23 = sphi 0, %s21
      %s24 = sphi 0, %s22
      %s36 = sphi 0, %s38
      %s39 = sphi 0, %s36
      %s40 = sphi 0, %s39
      %s56 = sphi 0, %s40
      %s62 = sphi 0, %s64
      %s65 = sphi 0, %s62
      %s66 = sphi 0, %s65
      %s82 = sphi 0, %s66
      %s86 = sphi 0, %s86
      %s88 = sphi 0, %s86
      %s89 = sphi 0, %s88
      %s103 = sphi 0, %s89
      %s111 = sphi 0, %s113
      %s114 = sphi 0, %s111
      %s115 = sphi 0, %s114
      %s131 = sphi 0, %s115
    $region4: #{_lambda_.1} parent=1 // loop_header_branch
      %15 = sbr.rel (%p13) target = $region8
    $region5: #{_lambda_.1} parent=1 // loop_body
      %s17 = ssub.s32 %s12, 1
      %s18 = ssub.s32 %s12, 2
      %s25 = sadd.s32 1, %s20
      %p26 = scmp.ge.s32.totalorder %s25, 1
      %s27 = scalar_select %p26, 0, %s25
      %s28 = sadd.s32 1, %s19
      %s29 = scalar_select %p26, %s28, %s19
      %p30 = scmp.ge.s32.totalorder %s29, 2
      %s31 = scalar_select %p30, 0, %s29
      %s32 = ssub.s32 %s19, %s31
      %s33 = ssub.s32 %s20, %s27
      %s34 = sor.u32 %s32, %s33
      %p35 = scmp.eq.s32.totalorder %s34, 0
      %s37 = sadd.s32 %s36, 1
      %s38 = scalar_select %p35, %s36, %s37
      %p41 = pneg %p35
      %p42 = scmp.eq.s32.totalorder %s12, 1
      %p43 = por %p41, %p42
      %p44 = scmp.ne.s32.totalorder %s36, %s39
      %p45 = scmp.eq.s32.totalorder %s12, 0
      %p46 = por %p44, %p45
      %p47 = scmp.ne.s32.totalorder %s36, %s39
      %p48 = scmp.eq.s32.totalorder %s17, 1
      %p49 = por %p47, %p48
      %p50 = scmp.ne.s32.totalorder %s39, %s40
      %p51 = scmp.eq.s32.totalorder %s17, 0
      %p52 = por %p50, %p51
      %p53 = scmp.ne.s32.totalorder %s39, %s40
      %p54 = scmp.eq.s32.totalorder %s18, 1
      %p55 = por %p53, %p54
      %p57 = scmp.ne.s32.totalorder %s40, %s56
      %p58 = scmp.eq.s32.totalorder %s18, 0
      %p59 = por %p57, %p58
      %s60 = ssub.s32 %s19, %s31
      %p61 = scmp.eq.s32.totalorder %s60, 0
      %s63 = sadd.s32 %s62, 1
      %s64 = scalar_select %p61, %s62, %s63
      %p67 = pneg %p61
      %p68 = scmp.eq.s32.totalorder %s12, 1
      %p69 = por %p67, %p68
      %p70 = scmp.ne.s32.totalorder %s62, %s65
      %p71 = scmp.eq.s32.totalorder %s12, 0
      %p72 = por %p70, %p71
      %p73 = scmp.ne.s32.totalorder %s62, %s65
      %p74 = scmp.eq.s32.totalorder %s17, 1
      %p75 = por %p73, %p74
      %p76 = scmp.ne.s32.totalorder %s65, %s66
      %p77 = scmp.eq.s32.totalorder %s17, 0
      %p78 = por %p76, %p77
      %p79 = scmp.ne.s32.totalorder %s65, %s66
      %p80 = scmp.eq.s32.totalorder %s18, 1
      %p81 = por %p79, %p80
      %p83 = scmp.ne.s32.totalorder %s66, %s82
      %p84 = scmp.eq.s32.totalorder %s18, 0
      %p85 = por %p83, %p84
      %s87 = sadd.s32 %s86, 1
      %p90 = scmp.eq.s32.totalorder %s12, 1
      %p91 = scmp.ne.s32.totalorder %s86, %s88
      %p92 = scmp.eq.s32.totalorder %s12, 0
      %p93 = por %p91, %p92
      %p94 = scmp.ne.s32.totalorder %s86, %s88
      %p95 = scmp.eq.s32.totalorder %s17, 1
      %p96 = por %p94, %p95
      %p97 = scmp.ne.s32.totalorder %s88, %s89
      %p98 = scmp.eq.s32.totalorder %s17, 0
      %p99 = por %p97, %p98
      %p100 = scmp.ne.s32.totalorder %s88, %s89
      %p101 = scmp.eq.s32.totalorder %s18, 1
      %p102 = por %p100, %p101
      %p104 = scmp.ne.s32.totalorder %s89, %s103
      %p105 = scmp.eq.s32.totalorder %s18, 0
      %p106 = por %p104, %p105
      %s107 = ssub.s32 %s19, %s31
      %s108 = ssub.s32 %s20, %s27
      %s109 = sor.u32 %s107, %s108
      %p110 = scmp.eq.s32.totalorder %s109, 0
      %s112 = sadd.s32 %s111, 1
      %s113 = scalar_select %p110, %s111, %s112
      %p116 = pneg %p110
      %p117 = scmp.eq.s32.totalorder %s12, 1
      %p118 = por %p116, %p117
      %p119 = scmp.ne.s32.totalorder %s111, %s114
      %p120 = scmp.eq.s32.totalorder %s12, 0
      %p121 = por %p119, %p120
      %p122 = scmp.ne.s32.totalorder %s111, %s114
      %p123 = scmp.eq.s32.totalorder %s17, 1
      %p124 = por %p122, %p123
      %p125 = scmp.ne.s32.totalorder %s114, %s115
      %p126 = scmp.eq.s32.totalorder %s17, 0
      %p127 = por %p125, %p126
      %p128 = scmp.ne.s32.totalorder %s114, %s115
      %p129 = scmp.eq.s32.totalorder %s18, 1
      %p130 = por %p128, %p129
      %p132 = scmp.ne.s32.totalorder %s115, %s131
      %p133 = scmp.eq.s32.totalorder %s18, 0
      %p134 = por %p132, %p133
      %p135 = scmp.le.s32.totalorder 1, %s12
      %p136 = scmp.lt.s32.totalorder %s12, 3
      %p137 = pnand %p135, %p136
      %p138 = pneg %p137
      // Predicated region
      $region9: #{_lambda_.1} parent=5 // pred_check
        _
      $region10: #{_lambda_.1} parent=5 // pred_check_branch
        %140 = sbr.rel (%p137) target = $region12
      $region11: #{_lambda_.1} parent=5 // pred_region
        %s141 = ssub.s32 %s12, 1
        // Predicated region
        $region13: #{_lambda_.1} parent=11 // pred_check
          %p142 = pneg %p99
        $region14: #{_lambda_.1} parent=11 // pred_check_branch
          %144 = sbr.rel (%p142) target = $region16
        $region15: #{_lambda_.1} parent=11 // pred_region
          _
        $region16: #{_lambda_.1} parent=11 // pred_fallthru
          _
      $region12: #{_lambda_.1} parent=5 // pred_fallthru
        _
      %p145 = scmp.lt.s32.totalorder %s12, 2
      // Predicated region
      $region17: #{_lambda_.1} parent=5 // pred_check
        %p146 = pneg %p145
      $region18: #{_lambda_.1} parent=5 // pred_check_branch
        %148 = sbr.rel (%p146) target = $region20
      $region19: #{_lambda_.1} parent=5 // pred_region
        // Predicated region
        $region21: #{_lambda_.1} parent=19 // pred_check
          %p149 = pneg %p46
        $region22: #{_lambda_.1} parent=19 // pred_check_branch
          %151 = sbr.rel (%p149) target = $region24
        $region23: #{_lambda_.1} parent=19 // pred_region
          %p152 = scmp.lt.s32.totalorder %s19, 1
          %s153 = scalar_select %p152, %s19, 1
          %p154 = scmp.lt.s32.totalorder %s20, 0
          %s155 = scalar_select %p154, %s20, 0
          %s156 = sadd.s32 %s155, %s153
          %s157 = smul.addr %s156, 8
          %s158 = scalar_lea.vmem %s0, %s157
        $region24: #{_lambda_.1} parent=19 // pred_fallthru
          _
        // Predicated region
        $region25: #{_lambda_.1} parent=19 // pred_check
          %p159 = pneg %p72
        $region26: #{_lambda_.1} parent=19 // pred_check_branch
          %161 = sbr.rel (%p159) target = $region28
        $region27: #{_lambda_.1} parent=19 // pred_region
          %p162 = scmp.lt.s32.totalorder %s19, 1
          %s163 = scalar_select %p162, %s19, 1
          %s164 = smul.addr %s163, 4
          %s165 = smul.addr %s164, 8
          %s166 = scalar_lea.vmem %s1, %s165
        $region28: #{_lambda_.1} parent=19 // pred_fallthru
          _
      $region20: #{_lambda_.1} parent=5 // pred_fallthru
        _
      %p167 = scmp.le.s32.totalorder 1, %s12
      %p168 = scmp.lt.s32.totalorder %s12, 3
      %p169 = pnand %p167, %p168
      %p170 = pneg %p169
      // Predicated region
      $region29: #{_lambda_.1} parent=5 // pred_check
        _
      $region30: #{_lambda_.1} parent=5 // pred_check_branch
        %172 = sbr.rel (%p169) target = $region32
      $region31: #{_lambda_.1} parent=5 // pred_region
        %s173 = ssub.s32 %s12, 1
        %p174 = scmp.lt.s32.totalorder %s21, 1
        %s175 = scalar_select %p174, %s21, 1
        %p176 = scmp.lt.s32.totalorder %s22, 0
        %s177 = scalar_select %p176, %s22, 0
        %s178 = sadd.s32 %s177, %s175
        %s179 = smul.addr %s178, 8
        %s180 = scalar_lea.vmem %s0, %s179
        %p181 = pneg %p52
        %p182 = pneg %p49
        %p183 = scmp.lt.s32.totalorder %s21, 1
        %s184 = scalar_select %p183, %s21, 1
        %s185 = smul.addr %s184, 4
        %s186 = smul.addr %s185, 8
        %s187 = scalar_lea.vmem %s1, %s186
        %p188 = pneg %p78
        %p189 = pneg %p75
        %p190 = pneg %p99
        %p191 = pneg %p96
        %p192 = pneg %p127
        %p193 = pneg %p124
        %s194 = sand.u32 %s114, 1
        %s195 = scalar_lea.sflag [#allocation3], %s194
        %s196 = sand.u32 %s114, 1
        %s197 = smul.addr %s196, 8
        %s198 = scalar_lea.vmem [#allocation2], %s197
        %p199 = scmp.lt.s32.totalorder %s21, 1
        %s200 = scalar_select %p199, %s21, 1
        %p201 = scmp.lt.s32.totalorder %s22, 0
        %s202 = scalar_select %p201, %s22, 0
        %s203 = sadd.s32 %s202, %s200
        %s204 = smul.addr %s203, 8
        %s205 = scalar_lea.vmem %s0, %s204
        %p206 = scmp.lt.s32.totalorder %s21, 1
        %s207 = scalar_select %p206, %s21, 1
        %s208 = smul.addr %s207, 4
        %s209 = smul.addr %s208, 8
        %s210 = scalar_lea.vmem %s1, %s209
        %v211 = vld [vmem:[%s2] sm:$0xff]
        %v212 = vld [vmem:[%s2 + $0x8] sm:$0xff]
        %v213 = vld [vmem:[%s2 + $0x10] sm:$0xff]
        %v214 = vld [vmem:[%s2 + $0x18] sm:$0xff]
        %v215 = vlaneseq
        %v216 = vand.u32 %v215, 127
        %v217 = vld [vmem:[%s205] sm:$0xff]
        %v218 = vld [vmem:[%s210] sm:$0xff]
        %v219 = vld [vmem:[%s210 + $0x8] sm:$0xff]
        %v220 = vld [vmem:[%s210 + $0x10] sm:$0xff]
        %v221 = vld [vmem:[%s210 + $0x18] sm:$0xff]
        %v222 = vperm.slane %v217, 0
        %v223 = vlaneseq
        %v224 = vshrl.u32 %v223, 7
        %226 = vset.pattern.permute.xlu0 %v224
        %227 = vperm.xlu0 %226, %v222
        %v228 = vpop.permute.xlu0 %227
        %v229 = vlaneseq
        %v230 = vshrl.u32 %v229, 7
        %v231 = vadd.s32 %v230, 8
        %232 = vset.pattern.permute.xlu0 %v231
        %233 = vperm.xlu0 %232, %v222
        %v234 = vpop.permute.xlu0 %233
        %v235 = vlaneseq
        %v236 = vshrl.u32 %v235, 7
        %v237 = vadd.s32 %v236, 16
        %238 = vset.pattern.permute.xlu0 %v237
        %239 = vperm.xlu0 %238, %v222
        %v240 = vpop.permute.xlu0 %239
        %v241 = vlaneseq
        %v242 = vshrl.u32 %v241, 7
        %v243 = vadd.s32 %v242, 24
        %244 = vset.pattern.permute.xlu0 %v243
        %245 = vperm.xlu0 %244, %v222
        %v246 = vpop.permute.xlu0 %245
        %v247 = vperm.slane %v217, 1
        %v248 = vlaneseq
        %v249 = vshrl.u32 %v248, 7
        %251 = vset.pattern.permute.xlu0 %v249
        %252 = vperm.xlu0 %251, %v247
        %v253 = vpop.permute.xlu0 %252
        %v254 = vlaneseq
        %v255 = vshrl.u32 %v254, 7
        %v256 = vadd.s32 %v255, 8
        %257 = vset.pattern.permute.xlu0 %v256
        %258 = vperm.xlu0 %257, %v247
        %v259 = vpop.permute.xlu0 %258
        %v260 = vlaneseq
        %v261 = vshrl.u32 %v260, 7
        %v262 = vadd.s32 %v261, 16
        %263 = vset.pattern.permute.xlu0 %v262
        %264 = vperm.xlu0 %263, %v247
        %v265 = vpop.permute.xlu0 %264
        %v266 = vlaneseq
        %v267 = vshrl.u32 %v266, 7
        %v268 = vadd.s32 %v267, 24
        %269 = vset.pattern.permute.xlu0 %v268
        %270 = vperm.xlu0 %269, %v247
        %v271 = vpop.permute.xlu0 %270
        %v272 = vperm.slane %v217, 2
        %v273 = vlaneseq
        %v274 = vshrl.u32 %v273, 7
        %276 = vset.pattern.permute.xlu0 %v274
        %277 = vperm.xlu0 %276, %v272
        %v278 = vpop.permute.xlu0 %277
        %v279 = vlaneseq
        %v280 = vshrl.u32 %v279, 7
        %v281 = vadd.s32 %v280, 8
        %282 = vset.pattern.permute.xlu0 %v281
        %283 = vperm.xlu0 %282, %v272
        %v284 = vpop.permute.xlu0 %283
        %v285 = vlaneseq
        %v286 = vshrl.u32 %v285, 7
        %v287 = vadd.s32 %v286, 16
        %288 = vset.pattern.permute.xlu0 %v287
        %289 = vperm.xlu0 %288, %v272
        %v290 = vpop.permute.xlu0 %289
        %v291 = vlaneseq
        %v292 = vshrl.u32 %v291, 7
        %v293 = vadd.s32 %v292, 24
        %294 = vset.pattern.permute.xlu0 %v293
        %295 = vperm.xlu0 %294, %v272
        %v296 = vpop.permute.xlu0 %295
        %v297 = vperm.slane %v217, 3
        %v298 = vlaneseq
        %v299 = vshrl.u32 %v298, 7
        %301 = vset.pattern.permute.xlu0 %v299
        %302 = vperm.xlu0 %301, %v297
        %v303 = vpop.permute.xlu0 %302
        %v304 = vlaneseq
        %v305 = vshrl.u32 %v304, 7
        %v306 = vadd.s32 %v305, 8
        %307 = vset.pattern.permute.xlu0 %v306
        %308 = vperm.xlu0 %307, %v297
        %v309 = vpop.permute.xlu0 %308
        %v310 = vlaneseq
        %v311 = vshrl.u32 %v310, 7
        %v312 = vadd.s32 %v311, 16
        %313 = vset.pattern.permute.xlu0 %v312
        %314 = vperm.xlu0 %313, %v297
        %v315 = vpop.permute.xlu0 %314
        %v316 = vlaneseq
        %v317 = vshrl.u32 %v316, 7
        %v318 = vadd.s32 %v317, 24
        %319 = vset.pattern.permute.xlu0 %v318
        %320 = vperm.xlu0 %319, %v297
        %v321 = vpop.permute.xlu0 %320
        %v322 = vperm.slane %v217, 4
        %v323 = vlaneseq
        %v324 = vshrl.u32 %v323, 7
        %326 = vset.pattern.permute.xlu0 %v324
        %327 = vperm.xlu0 %326, %v322
        %v328 = vpop.permute.xlu0 %327
        %v329 = vlaneseq
        %v330 = vshrl.u32 %v329, 7
        %v331 = vadd.s32 %v330, 8
        %332 = vset.pattern.permute.xlu0 %v331
        %333 = vperm.xlu0 %332, %v322
        %v334 = vpop.permute.xlu0 %333
        %v335 = vlaneseq
        %v336 = vshrl.u32 %v335, 7
        %v337 = vadd.s32 %v336, 16
        %338 = vset.pattern.permute.xlu0 %v337
        %339 = vperm.xlu0 %338, %v322
        %v340 = vpop.permute.xlu0 %339
        %v341 = vlaneseq
        %v342 = vshrl.u32 %v341, 7
        %v343 = vadd.s32 %v342, 24
        %344 = vset.pattern.permute.xlu0 %v343
        %345 = vperm.xlu0 %344, %v322
        %v346 = vpop.permute.xlu0 %345
        %v347 = vperm.slane %v217, 5
        %v348 = vlaneseq
        %v349 = vshrl.u32 %v348, 7
        %351 = vset.pattern.permute.xlu0 %v349
        %352 = vperm.xlu0 %351, %v347
        %v353 = vpop.permute.xlu0 %352
        %v354 = vlaneseq
        %v355 = vshrl.u32 %v354, 7
        %v356 = vadd.s32 %v355, 8
        %357 = vset.pattern.permute.xlu0 %v356
        %358 = vperm.xlu0 %357, %v347
        %v359 = vpop.permute.xlu0 %358
        %v360 = vlaneseq
        %v361 = vshrl.u32 %v360, 7
        %v362 = vadd.s32 %v361, 16
        %363 = vset.pattern.permute.xlu0 %v362
        %364 = vperm.xlu0 %363, %v347
        %v365 = vpop.permute.xlu0 %364
        %v366 = vlaneseq
        %v367 = vshrl.u32 %v366, 7
        %v368 = vadd.s32 %v367, 24
        %369 = vset.pattern.permute.xlu0 %v368
        %370 = vperm.xlu0 %369, %v347
        %v371 = vpop.permute.xlu0 %370
        %v372 = vperm.slane %v217, 6
        %v373 = vlaneseq
        %v374 = vshrl.u32 %v373, 7
        %376 = vset.pattern.permute.xlu0 %v374
        %377 = vperm.xlu0 %376, %v372
        %v378 = vpop.permute.xlu0 %377
        %v379 = vlaneseq
        %v380 = vshrl.u32 %v379, 7
        %v381 = vadd.s32 %v380, 8
        %382 = vset.pattern.permute.xlu0 %v381
        %383 = vperm.xlu0 %382, %v372
        %v384 = vpop.permute.xlu0 %383
        %v385 = vlaneseq
        %v386 = vshrl.u32 %v385, 7
        %v387 = vadd.s32 %v386, 16
        %388 = vset.pattern.permute.xlu0 %v387
        %389 = vperm.xlu0 %388, %v372
        %v390 = vpop.permute.xlu0 %389
        %v391 = vlaneseq
        %v392 = vshrl.u32 %v391, 7
        %v393 = vadd.s32 %v392, 24
        %394 = vset.pattern.permute.xlu0 %v393
        %395 = vperm.xlu0 %394, %v372
        %v396 = vpop.permute.xlu0 %395
        %v397 = vperm.slane %v217, 7
        %v398 = vlaneseq
        %v399 = vshrl.u32 %v398, 7
        %401 = vset.pattern.permute.xlu0 %v399
        %402 = vperm.xlu0 %401, %v397
        %v403 = vpop.permute.xlu0 %402
        %v404 = vlaneseq
        %v405 = vshrl.u32 %v404, 7
        %v406 = vadd.s32 %v405, 8
        %407 = vset.pattern.permute.xlu0 %v406
        %408 = vperm.xlu0 %407, %v397
        %v409 = vpop.permute.xlu0 %408
        %v410 = vlaneseq
        %v411 = vshrl.u32 %v410, 7
        %v412 = vadd.s32 %v411, 16
        %413 = vset.pattern.permute.xlu0 %v412
        %414 = vperm.xlu0 %413, %v397
        %v415 = vpop.permute.xlu0 %414
        %v416 = vlaneseq
        %v417 = vshrl.u32 %v416, 7
        %v418 = vadd.s32 %v417, 24
        %419 = vset.pattern.permute.xlu0 %v418
        %420 = vperm.xlu0 %419, %v397
        %v421 = vpop.permute.xlu0 %420
        %v422 = vadd.f32 %v228, %v218
        %v423 = vadd.f32 %v234, %v219
        %v424 = vadd.f32 %v240, %v220
        %v425 = vadd.f32 %v246, %v221
        %v426 = vadd.f32 %v253, %v218
        %v427 = vadd.f32 %v259, %v219
        %v428 = vadd.f32 %v265, %v220
        %v429 = vadd.f32 %v271, %v221
        %v430 = vadd.f32 %v278, %v218
        %v431 = vadd.f32 %v284, %v219
        %v432 = vadd.f32 %v290, %v220
        %v433 = vadd.f32 %v296, %v221
        %v434 = vadd.f32 %v303, %v218
        %v435 = vadd.f32 %v309, %v219
        %v436 = vadd.f32 %v315, %v220
        %v437 = vadd.f32 %v321, %v221
        %v438 = vadd.f32 %v328, %v218
        %v439 = vadd.f32 %v334, %v219
        %v440 = vadd.f32 %v340, %v220
        %v441 = vadd.f32 %v346, %v221
        %v442 = vadd.f32 %v353, %v218
        %v443 = vadd.f32 %v359, %v219
        %v444 = vadd.f32 %v365, %v220
        %v445 = vadd.f32 %v371, %v221
        %v446 = vadd.f32 %v378, %v218
        %v447 = vadd.f32 %v384, %v219
        %v448 = vadd.f32 %v390, %v220
        %v449 = vadd.f32 %v396, %v221
        %v450 = vadd.f32 %v403, %v218
        %v451 = vadd.f32 %v409, %v219
        %v452 = vadd.f32 %v415, %v220
        %v453 = vadd.f32 %v421, %v221
        %v454 = vtanh.pop %v422
        %v455 = vtanh.pop %v423
        %v456 = vtanh.pop %v424
        %v457 = vtanh.pop %v425
        %v458 = vtanh.pop %v426
        %v459 = vtanh.pop %v427
        %v460 = vtanh.pop %v428
        %v461 = vtanh.pop %v429
        %v462 = vtanh.pop %v430
        %v463 = vtanh.pop %v431
        %v464 = vtanh.pop %v432
        %v465 = vtanh.pop %v433
        %v466 = vtanh.pop %v434
        %v467 = vtanh.pop %v435
        %v468 = vtanh.pop %v436
        %v469 = vtanh.pop %v437
        %v470 = vtanh.pop %v438
        %v471 = vtanh.pop %v439
        %v472 = vtanh.pop %v440
        %v473 = vtanh.pop %v441
        %v474 = vtanh.pop %v442
        %v475 = vtanh.pop %v443
        %v476 = vtanh.pop %v444
        %v477 = vtanh.pop %v445
        %v478 = vtanh.pop %v446
        %v479 = vtanh.pop %v447
        %v480 = vtanh.pop %v448
        %v481 = vtanh.pop %v449
        %v482 = vtanh.pop %v450
        %v483 = vtanh.pop %v451
        %v484 = vtanh.pop %v452
        %v485 = vtanh.pop %v453
        %487 = vset.pattern.permute.xlu0 0
        %488 = vperm.xlu0 %487, %v211
        %v489 = vpop.permute.xlu0 %488
        %492 = vset.pattern.permute.xlu0 0
        %493 = vperm.xlu0 %492, %v212
        %v494 = vpop.permute.xlu0 %493
        %497 = vset.pattern.permute.xlu0 0
        %498 = vperm.xlu0 %497, %v213
        %v499 = vpop.permute.xlu0 %498
        %502 = vset.pattern.permute.xlu0 0
        %503 = vperm.xlu0 %502, %v214
        %v504 = vpop.permute.xlu0 %503
        %v506 = vmul.f32 %v454, %v489
        %v507 = vmul.f32 %v455, %v494
        %v508 = vmul.f32 %v456, %v499
        %v509 = vmul.f32 %v457, %v504
        %v510 = vmul.f32 %v458, %v489
        %v511 = vmul.f32 %v459, %v494
        %v512 = vmul.f32 %v460, %v499
        %v513 = vmul.f32 %v461, %v504
        %v514 = vmul.f32 %v462, %v489
        %v515 = vmul.f32 %v463, %v494
        %v516 = vmul.f32 %v464, %v499
        %v517 = vmul.f32 %v465, %v504
        %v518 = vmul.f32 %v466, %v489
        %v519 = vmul.f32 %v467, %v494
        %v520 = vmul.f32 %v468, %v499
        %v521 = vmul.f32 %v469, %v504
        %v522 = vmul.f32 %v470, %v489
        %v523 = vmul.f32 %v471, %v494
        %v524 = vmul.f32 %v472, %v499
        %v525 = vmul.f32 %v473, %v504
        %v526 = vmul.f32 %v474, %v489
        %v527 = vmul.f32 %v475, %v494
        %v528 = vmul.f32 %v476, %v499
        %v529 = vmul.f32 %v477, %v504
        %v530 = vmul.f32 %v478, %v489
        %v531 = vmul.f32 %v479, %v494
        %v532 = vmul.f32 %v480, %v499
        %v533 = vmul.f32 %v481, %v504
        %v534 = vmul.f32 %v482, %v489
        %v535 = vmul.f32 %v483, %v494
        %v536 = vmul.f32 %v484, %v499
        %v537 = vmul.f32 %v485, %v504
        %v538 = vadd.f32 %v506, %v507
        %v539 = vadd.f32 %v538, %v508
        %v540 = vadd.f32 %v539, %v509
        %v541 = vrot.slane %v540, 4
        %v542 = vadd.f32 %v540, %v541
        %v543 = vrot.slane %v542, 2
        %v544 = vadd.f32 %v542, %v543
        %v545 = vrot.slane %v544, 1
        %v546 = vadd.f32 %v544, %v545
        %v547 = vadd.f32 %v510, %v511
        %v548 = vadd.f32 %v547, %v512
        %v549 = vadd.f32 %v548, %v513
        %v550 = vrot.slane %v549, 4
        %v551 = vadd.f32 %v549, %v550
        %v552 = vrot.slane %v551, 2
        %v553 = vadd.f32 %v551, %v552
        %v554 = vrot.slane %v553, 1
        %v555 = vadd.f32 %v553, %v554
        %v556 = vadd.f32 %v514, %v515
        %v557 = vadd.f32 %v556, %v516
        %v558 = vadd.f32 %v557, %v517
        %v559 = vrot.slane %v558, 4
        %v560 = vadd.f32 %v558, %v559
        %v561 = vrot.slane %v560, 2
        %v562 = vadd.f32 %v560, %v561
        %v563 = vrot.slane %v562, 1
        %v564 = vadd.f32 %v562, %v563
        %v565 = vadd.f32 %v518, %v519
        %v566 = vadd.f32 %v565, %v520
        %v567 = vadd.f32 %v566, %v521
        %v568 = vrot.slane %v567, 4
        %v569 = vadd.f32 %v567, %v568
        %v570 = vrot.slane %v569, 2
        %v571 = vadd.f32 %v569, %v570
        %v572 = vrot.slane %v571, 1
        %v573 = vadd.f32 %v571, %v572
        %v574 = vadd.f32 %v522, %v523
        %v575 = vadd.f32 %v574, %v524
        %v576 = vadd.f32 %v575, %v525
        %v577 = vrot.slane %v576, 4
        %v578 = vadd.f32 %v576, %v577
        %v579 = vrot.slane %v578, 2
        %v580 = vadd.f32 %v578, %v579
        %v581 = vrot.slane %v580, 1
        %v582 = vadd.f32 %v580, %v581
        %v583 = vadd.f32 %v526, %v527
        %v584 = vadd.f32 %v583, %v528
        %v585 = vadd.f32 %v584, %v529
        %v586 = vrot.slane %v585, 4
        %v587 = vadd.f32 %v585, %v586
        %v588 = vrot.slane %v587, 2
        %v589 = vadd.f32 %v587, %v588
        %v590 = vrot.slane %v589, 1
        %v591 = vadd.f32 %v589, %v590
        %v592 = vadd.f32 %v530, %v531
        %v593 = vadd.f32 %v592, %v532
        %v594 = vadd.f32 %v593, %v533
        %v595 = vrot.slane %v594, 4
        %v596 = vadd.f32 %v594, %v595
        %v597 = vrot.slane %v596, 2
        %v598 = vadd.f32 %v596, %v597
        %v599 = vrot.slane %v598, 1
        %v600 = vadd.f32 %v598, %v599
        %v601 = vadd.f32 %v534, %v535
        %v602 = vadd.f32 %v601, %v536
        %v603 = vadd.f32 %v602, %v537
        %v604 = vrot.slane %v603, 4
        %v605 = vadd.f32 %v603, %v604
        %v606 = vrot.slane %v605, 2
        %v607 = vadd.f32 %v605, %v606
        %v608 = vrot.slane %v607, 1
        %v609 = vadd.f32 %v607, %v608
        %vm610 = vcmp.lt.s32.totalorder %v216, 8
        %vm619 = vcmask 1041409
        %v620 = vsel %vm619, %v555, %v546
        %vm621 = vcmask 1042434
        %v622 = vsel %vm621, %v564, %v620
        %vm623 = vcmask 1043459
        %v624 = vsel %vm623, %v573, %v622
        %vm625 = vcmask 1044484
        %v626 = vsel %vm625, %v582, %v624
        %vm627 = vcmask 1045509
        %v628 = vsel %vm627, %v591, %v626
        %vm629 = vcmask 1046534
        %v630 = vsel %vm629, %v600, %v628
        %vm631 = vcmask 1047559
        %v632 = vsel %vm631, %v609, %v630
        %v634 = vsel %vm610, %v632, -1e+30
        %635 = vmax.xlane.f32.xlu0 %v634
        %v636 = vpop.xlane.xlu0 %635
        %v637 = vsub.f32 %v634, %v636
        %v638 = vmul.f32 %v637, 1.442695
        %v639 = vpow.pop %v638
        %640 = vadd.xlane.f32.xlu0 %v639
        %v641 = vpop.xlane.xlu0 %640
        %v642 = vrcp.pop %v641
        %v643 = vmul.f32 %v641, %v642
        %v644 = vsub.f32 2.0, %v643
        %v645 = vmul.f32 %v642, %v644
        %v646 = vmul.f32 %v639, %v645
        %647 = vst [vmem:[%s198] sm:$0xff] %v646
        %s648 = sand.u32 %s114, 1
        %s649 = scalar_lea.sflag [#allocation3], %s648
        %s650 = sand.u32 %s114, 1
        %s651 = smul.addr %s650, 8
        %s652 = scalar_lea.vmem [#allocation2], %s651
        // Predicated region
        $region33: #{_lambda_.1} parent=31 // pred_check
          %p653 = pneg %p124
        $region34: #{_lambda_.1} parent=31 // pred_check_branch
          %655 = sbr.rel (%p653) target = $region36
        $region35: #{_lambda_.1} parent=31 // pred_region
          %657 = vsyncadd %s649, 0
          %s658 = sadd.s32 %s22, %s21
          %s659 = smul.addr %s658, 8
          %s660 = scalar_lea.hbm %s3, %s659
          %s662 = sshll.u32 %s652, 4
          %s663 = int_to_ptr.vmem [resolvable:$true] %s662
          %s664 = sshll.u32 %s660, 4
          %s665 = int_to_ptr.hbm [resolvable:$true] %s664
          %667 = dma.vmem_to_hbm [thread:$0]  %s663, 128, %s665, %s649
        $region36: #{_lambda_.1} parent=31 // pred_fallthru
          _
      $region32: #{_lambda_.1} parent=5 // pred_fallthru
        _
      %p668 = scmp.le.s32.totalorder 2, %s12
      // Predicated region
      $region37: #{_lambda_.1} parent=5 // pred_check
        %p669 = pneg %p668
      $region38: #{_lambda_.1} parent=5 // pred_check_branch
        %671 = sbr.rel (%p669) target = $region40
      $region39: #{_lambda_.1} parent=5 // pred_region
        %s672 = ssub.s32 %s12, 2
        // Predicated region
        $region41: #{_lambda_.1} parent=39 // pred_check
          %p673 = pneg %p130
        $region42: #{_lambda_.1} parent=39 // pred_check_branch
          %675 = sbr.rel (%p673) target = $region44
        $region43: #{_lambda_.1} parent=39 // pred_region
          %s676 = sand.u32 %s115, 1
          %s677 = scalar_lea.sflag [#allocation3], %s676
          %s678 = sand.u32 %s115, 1
          %s679 = smul.addr %s678, 8
          %s680 = scalar_lea.vmem [#allocation2], %s679
          %682 = dma.done %s677, 128
        $region44: #{_lambda_.1} parent=39 // pred_fallthru
          _
      $region40: #{_lambda_.1} parent=5 // pred_fallthru
        _
    $region6: #{_lambda_.1} parent=1 // loop_footer
      %s16 = sadd.s32 1, %s12
    $region7: #{_lambda_.1} parent=1 // loop_footer_branch
      %11 = sbr.rel target = $region3
    $region8: #{_lambda_.1} parent=1 // loop_exit
      _
    %683 = vsyncpa [#allocation3], 1
    %s684 = scalar_lea.sflag [#allocation3], 1
    %685 = vsyncpa %s684, 1

</llo_original>
